<compile_context>
chip_gen: v7x
topology: tpu7x:2x2x1
jax: 0.10.0
libtpu: 0.0.40
codegen_flags: <defaults>
</compile_context>

<pallas_src>
import functools

import jax
import jax.numpy as jnp
import numpy as np
from jax import lax
from jax.experimental import pallas as pl
from jax.experimental.pallas import tpu as pltpu


def _cdiv(a, b):
    return -(-a // b)


def _round_up(x, m):
    return _cdiv(x, m) * m


def _use_bf16_exp_default():
    """bf16 EUP/VPU path exists on v6e/v7x; keep f32 on v5e and older/unknown."""
    try:
        kind = jax.devices()[0].device_kind.lower()
    except Exception:
        return False
    return any(tag in kind for tag in ("v6", "v7", "7x"))


def _soft_hist_kernel(x_ref, o_ref, *, num_bins, n_chunks, chunk_t, unroll,
                      use_bf16, defer_reduce):
    """Accumulate per-(feature, bin) vote sums over the example axis.

    x_ref : (block_f, block_t)      features on sublanes, examples on lanes
    o_ref : (1, block_f, num_bins)  f32 vote sums; resident across the example
                                    grid axis (accumulator), finalized in the
                                    wrapper.
    """
    t = pl.program_id(2)

    @pl.when(t == 0)
    def _():
        o_ref[...] = jnp.zeros_like(o_ref)

    block_f = x_ref.shape[0]
    two_b = 2.0 * num_bins
    # Scaled bin centers: 2*B * (b + 0.5)/B = 2*b + 1.  Hoisted out of the loop.
    c = (2.0 * lax.broadcasted_iota(jnp.int32, (1, num_bins, 1), 1)
         .astype(jnp.float32) + 1.0)                       # (1, B, 1)

    def votes(i):
        start = pl.multiple_of(i * chunk_t, chunk_t)
        xi = x_ref[:, pl.ds(start, chunk_t)]               # (block_f, chunk_t)
        wx = two_b * xi                                    # scale once per element
        s = wx[:, None, :] - c                             # (block_f, B, chunk_t) f32
        if use_bf16:
            # Cast AFTER the subtract: keeps full accuracy near the bin centre
            # while still halving the EUP pushes.  (Casting before the subtract
            # would shave ~15% more inner-loop VALU at ~1-2% vote error; kept
            # conservative here.)
            s = s.astype(jnp.bfloat16)
        return jnp.exp(-(s * s))                           # EUP (bf16 on v6e/v7x)

    if defer_reduce:
        # Deferred reduction: plain lane-wise f32 adds per chunk, a single XLU
        # cross-lane reduce per grid step.  Carry stays in vregs (no VMEM
        # scratch -> no store-slot pressure on v5e).
        def body(i, acc):
            return acc + votes(i).astype(jnp.float32)

        acc = lax.fori_loop(
            0, n_chunks, body,
            jnp.zeros((block_f, num_bins, chunk_t), jnp.float32),
            unroll=unroll)
        partial = jnp.sum(acc, axis=-1)                    # (block_f, B)
    else:
        # Fallback for very large num_bins where the deferred carry would spill
        # the vreg file: reduce every chunk.
        def body(i, acc):
            return acc + jnp.sum(votes(i).astype(jnp.float32), axis=-1)

        partial = lax.fori_loop(
            0, n_chunks, body,
            jnp.zeros((block_f, num_bins), jnp.float32),
            unroll=unroll)

    o_ref[...] += partial[None]


def soft_histogram_rbf(x, num_bins, quantiles=False, *, max_block_t=8192,
                       chunk_t=128, unroll=4, use_bf16_exp=None):
    """x: (n_examples, n_features) float, as fed to the PyTorch module."""
    n_examples, n_features = x.shape
    if use_bf16_exp is None:
        use_bf16_exp = _use_bf16_exp_default()

    # (F, T): features on sublanes, examples on lanes.
    x_ft = jnp.asarray(x, jnp.float32).T

    # Feature tiling: block_f capped at 8 (one sublane group).  Pad F up to a
    # multiple of 8 with zero rows (dropped after the kernel) so odd feature
    # counts can never blow up the (block_f, B, chunk_t) temps.
    if n_features <= 8:
        block_f, f_pad = n_features, n_features
    else:
        block_f, f_pad = 8, _round_up(n_features, 8)

    # Example tiling: pad to chunk_t, split across n_par parallel partial
    # histograms (v7x megacore), and pick block_t as the largest multiple of
    # chunk_t (<= max_block_t) that exactly tiles the padded length.  Padding
    # waste is bounded by chunk_t-1 plus ~chunk_t per extra block; every padded
    # column is an exact zero corrected analytically below.
    k = _cdiv(max(n_examples, 1), chunk_t)        # 128-wide chunks of real data
    n_par = 2 if k >= 2 else 1                    # leading parallel axis (v7x)
    chunks_per_par = _cdiv(k, n_par)
    m_max = max(1, max_block_t // chunk_t)
    n_t = _cdiv(chunks_per_par, m_max)            # t-blocks per parallel half
    m = _cdiv(chunks_per_par, n_t)                # chunks per t-block
    block_t = m * chunk_t
    t_pad = n_par * n_t * block_t
    pad_t = t_pad - n_examples
    pad_f = f_pad - n_features
    if pad_t or pad_f:
        x_ft = jnp.pad(x_ft, ((0, pad_f), (0, pad_t)))

    # Deferred (once-per-grid-step) lane reduction needs a (block_f, B, chunk_t)
    # f32 carry; keep it while it fits comfortably in the 64-vreg file.
    defer_reduce = block_f * num_bins <= 256

    kernel = functools.partial(
        _soft_hist_kernel,
        num_bins=num_bins, n_chunks=m, chunk_t=chunk_t,
        unroll=max(1, min(unroll, m)), use_bf16=use_bf16_exp,
        defer_reduce=defer_reduce)

    cost = pl.CostEstimate(
        flops=int(4 * num_bins * f_pad * t_pad),
        transcendentals=int(num_bins * f_pad * t_pad),
        bytes_accessed=int(4 * f_pad * t_pad + 4 * n_par * f_pad * num_bins))

    sums = pl.pallas_call(
        kernel,
        out_shape=jax.ShapeDtypeStruct((n_par, f_pad, num_bins), jnp.float32),
        grid_spec=pltpu.PrefetchScalarGridSpec(
            num_scalar_prefetch=0,
            grid=(n_par, f_pad // block_f, n_t),
            in_specs=[pl.BlockSpec((block_f, block_t),
                                   lambda p, f, t: (f, p * n_t + t))],
            out_specs=pl.BlockSpec((1, block_f, num_bins),
                                   lambda p, f, t: (p, f, 0)),
        ),
        compiler_params=pltpu.CompilerParams(
            dimension_semantics=("parallel", "parallel", "arbitrary")),
        cost_estimate=cost,
    )(x_ft)

    # Combine the parallel partial histograms and drop padded feature rows.
    sums = jnp.sum(sums, axis=0)[:n_features]

    # Exact correction for zero-padded examples: a zero value contributes
    # exp(-(2*b + 1)^2) to bin b of every feature.  (With use_bf16_exp the
    # in-kernel contribution is the bf16-EUP value; the mismatch is ~0.4% of
    # exp(-1) per padded example and only pad/n_examples of it reaches the
    # mean -- far inside the bf16 tolerance.)
    if pad_t:
        corr = pad_t * np.exp(
            -(2.0 * np.arange(num_bins, dtype=np.float64) + 1.0) ** 2)
        sums = sums - jnp.asarray(corr, jnp.float32)[None, :]

    hist = sums / n_examples                       # AvgPool1d over examples
    if quantiles:
        hist = jnp.cumsum(hist, axis=1)            # cumsum over bins per feature
    # torch: output (1, F*B, 1) -> flatten() -> (F*B,), feature-major then bin
    return hist.reshape(-1)


def _reference(x, num_bins, quantiles=False):
    """Pure-JAX reference of the PyTorch forward."""
    x = jnp.asarray(x, jnp.float32)
    centers = (jnp.arange(num_bins, dtype=jnp.float32) + 0.5) / num_bins
    diff = x.T[:, None, :] - centers[None, :, None]        # (F, B, T)
    vote = jnp.exp(-(2.0 * num_bins * jnp.abs(diff)) ** 2)
    hist = vote.mean(axis=-1)                              # (F, B)
    if quantiles:
        hist = jnp.cumsum(hist, axis=1)
    return hist.reshape(-1)


if __name__ == "__main__":
    num_bins = 16
    bf16 = _use_bf16_exp_default()
    tol = 2e-2 if bf16 else 1e-5

    key = jax.random.PRNGKey(0)
    k1, k2, k3 = jax.random.split(key, 3)

    # Case 1: divisible example count, plain histogram.
    x1 = jax.random.uniform(k1, (256, 8), dtype=jnp.float32)
    out1 = jax.block_until_ready(
        soft_histogram_rbf(x1, num_bins, quantiles=False, use_bf16_exp=bf16))
    ref1 = _reference(x1, num_bins, quantiles=False)
    np.testing.assert_allclose(np.asarray(out1), np.asarray(ref1),
                               rtol=tol, atol=tol)
    assert out1.shape == (8 * num_bins,)

    # Case 2: non-divisible example count (pad + analytic correction), quantiles.
    x2 = jax.random.uniform(k2, (200, 8), dtype=jnp.float32)
    out2 = jax.block_until_ready(
        soft_histogram_rbf(x2, num_bins, quantiles=True, use_bf16_exp=bf16))
    ref2 = _reference(x2, num_bins, quantiles=True)
    np.testing.assert_allclose(np.asarray(out2), np.asarray(ref2),
                               rtol=tol, atol=tol)
    assert out2.shape == (8 * num_bins,)

    # Case 3: multi-chunk blocks (unrolled inner loop) + feature padding path.
    x3 = jax.random.uniform(k3, (1000, 12), dtype=jnp.float32)
    out3 = jax.block_until_ready(
        soft_histogram_rbf(x3, num_bins, quantiles=False, use_bf16_exp=bf16))
    ref3 = _reference(x3, num_bins, quantiles=False)
    np.testing.assert_allclose(np.asarray(out3), np.asarray(ref3),
                               rtol=tol, atol=tol)
    assert out3.shape == (12 * num_bins,)

    print("KERNEL_OK")
</pallas_src>

<mosaic_0001>
module attributes {stable_mosaic.version = 11 : i64} {
  func.func @_soft_hist_kernel(%arg0: i32, %arg1: i32, %arg2: i32, %arg3: memref<8x128xf32, #tpu.memory_space<vmem>>, %arg4: memref<1x8x16xf32, #tpu.memory_space<vmem>>) attributes {dimension_semantics = [#tpu.dimension_semantics<parallel>, #tpu.dimension_semantics<parallel>, #tpu.dimension_semantics<arbitrary>], iteration_bounds = array<i64: 2, 1, 1>, scalar_prefetch = 0 : i64, scratch_operands = 0 : i64, tpu.core_type = #tpu.core_type<tc>, window_params = [{transform_indices = @transform_0, window_bounds = array<i64: 8, 128>}, {transform_indices = @transform_1, window_bounds = array<i64: 1, 8, 16>}]} {
    %c0_i32 = arith.constant 0 : i32
    %0 = arith.cmpi eq, %arg2, %c0_i32 : i32
    %1 = arith.extui %0 : i1 to i32
    %c0_i32_0 = arith.constant 0 : i32
    %2 = arith.cmpi ne, %1, %c0_i32_0 : i32
    scf.if %2 {
      %cst_13 = arith.constant 0.000000e+00 : f32
      %30 = vector.broadcast %cst_13 : f32 to vector<1x8x16xf32>
      %c0_14 = arith.constant 0 : index
      %c0_15 = arith.constant 0 : index
      %c0_16 = arith.constant 0 : index
      %31 = vector.load %arg4[%c0_14, %c0_15, %c0_16] : memref<1x8x16xf32, #tpu.memory_space<vmem>>, vector<1x8x16xf32>
      tpu.vector_store %arg4[%c0_14, %c0_15, %c0_16], %30 {strides = array<i32>} : memref<1x8x16xf32, #tpu.memory_space<vmem>>, vector<1x8x16xf32>,
    } else {
    }
    %3 = tpu.iota {dimensions = array<i32: 1>} : vector<1x16x1xi32>
    %4 = arith.sitofp %3 : vector<1x16x1xi32> to vector<1x16x1xf32>
    %cst = arith.constant 2.000000e+00 : f32
    %5 = vector.broadcast %cst : f32 to vector<1x16x1xf32>
    %6 = arith.mulf %5, %4 : vector<1x16x1xf32>
    %cst_1 = arith.constant 1.000000e+00 : f32
    %7 = vector.broadcast %cst_1 : f32 to vector<1x16x1xf32>
    %8 = arith.addf %6, %7 : vector<1x16x1xf32>
    %cst_2 = arith.constant 0.000000e+00 : f32
    %9 = vector.broadcast %cst_2 : f32 to vector<8x16x128xf32>
    %c0_i32_3 = arith.constant 0 : i32
    %c128_i32 = arith.constant 128 : i32
    %10 = arith.muli %c0_i32_3, %c128_i32 : i32
    %11 = tpu.assume_multiple %10, 128 : i32
    %c0 = arith.constant 0 : index
    %12 = arith.index_cast %11 : i32 to index
    %13 = vector.load %arg3[%c0, %12] : memref<8x128xf32, #tpu.memory_space<vmem>>, vector<8x128xf32>
    %cst_4 = arith.constant 3.200000e+01 : f32
    %14 = vector.broadcast %cst_4 : f32 to vector<8x128xf32>
    %15 = arith.mulf %14, %13 : vector<8x128xf32>
    %16 = vector.shape_cast %15 : vector<8x128xf32> to vector<8x1x128xf32>
    %17 = vector.broadcast %16 : vector<8x1x128xf32> to vector<8x16x128xf32>
    %18 = vector.broadcast %8 : vector<1x16x1xf32> to vector<8x16x128xf32>
    %19 = arith.subf %17, %18 : vector<8x16x128xf32>
    %20 = arith.mulf %19, %19 : vector<8x16x128xf32>
    %cst_5 = arith.constant 0.000000e+00 : f32
    %21 = vector.broadcast %cst_5 : f32 to vector<8x16x128xf32>
    %22 = arith.subf %21, %20 : vector<8x16x128xf32>
    %23 = math.exp %22 : vector<8x16x128xf32>
    %24 = arith.addf %9, %23 : vector<8x16x128xf32>
    %c1_i32 = arith.constant 1 : i32
    %cst_6 = arith.constant dense<0.000000e+00> : vector<8x16xf32>
    %25 = vector.multi_reduction <add>, %24, %cst_6 [2] : vector<8x16x128xf32> to vector<8x16xf32>
    %c0_7 = arith.constant 0 : index
    %c0_8 = arith.constant 0 : index
    %c0_9 = arith.constant 0 : index
    %26 = vector.load %arg4[%c0_7, %c0_8, %c0_9] : memref<1x8x16xf32, #tpu.memory_space<vmem>>, vector<1x8x16xf32>
    %27 = vector.shape_cast %25 : vector<8x16xf32> to vector<1x8x16xf32>
    %28 = arith.addf %26, %27 : vector<1x8x16xf32>
    %c0_10 = arith.constant 0 : index
    %c0_11 = arith.constant 0 : index
    %c0_12 = arith.constant 0 : index
    %29 = vector.load %arg4[%c0_10, %c0_11, %c0_12] : memref<1x8x16xf32, #tpu.memory_space<vmem>>, vector<1x8x16xf32>
    tpu.vector_store %arg4[%c0_10, %c0_11, %c0_12], %28 {strides = array<i32>} : memref<1x8x16xf32, #tpu.memory_space<vmem>>, vector<1x8x16xf32>,
    return
  }
  func.func @transform_0(%arg0: i32, %arg1: i32, %arg2: i32) -> (i32, i32) {
    %c1_i32 = arith.constant 1 : i32
    %0 = arith.muli %arg0, %c1_i32 : i32
    %1 = arith.addi %0, %arg2 : i32
    %c0_i32 = arith.constant 0 : i32
    return %arg1, %1 : i32, i32
  }
  func.func @transform_1(%arg0: i32, %arg1: i32, %arg2: i32) -> (i32, i32, i32) {
    %c0_i32 = arith.constant 0 : i32
    %c0_i32_0 = arith.constant 0 : i32
    return %arg0, %arg1, %c0_i32 : i32, i32, i32
  }
}

</mosaic_0001>

<llo_original>
// kernel: tpu_custom_call.1
$region0: #{tpu_custom_call.1}
  #allocation0 [shape = 'u32[]', space=smem, size = 0x4, offset = 0x4, fixed_abs, tag = 'smem constant byte address 0x4 - core index']
  #allocation1 [shape = 'u32[144,128]{1,0:T(1,128)}', space=vmem, size = 0x12000, scoped, tag = 'internal scratch']
  %s0 = inlined_call_operand.hbm [shape: f32[8,256], index: 0, kind: input, shape index: {}]
  %s1 = inlined_call_operand.hbm [shape: f32[2,8,16], index: 1, kind: output, shape index: {}]
  %s2 = sld [smem:[#allocation0]]
  $region45: #{tpu_custom_call.1} parent=0
    _
  %s4 = ssub.s32 1, %s2
  %s5 = scalar_select 0, %s4, %s2
  $region1: #{tpu_custom_call.1} parent=0
    #allocation2 [shape = 'u8[8192]{0}', space=vmem, size = 0x2000, scoped, tag = 'input window, operand 0']
    #allocation3 [shape = 's32[2]{0}', space=sflag, size = 0x8, scoped, tag = 'scoped memory for tpu_custom_call.1']
    #allocation4 [shape = 's32[2]{0}', space=sflag, size = 0x8, scoped, tag = 'scoped memory for tpu_custom_call.1']
    #allocation5 [shape = 'u8[8192]{0}', space=vmem, size = 0x2000, scoped, tag = 'output window, operand 0']
    %6 = vsyncpa [#allocation3], 0
    %s7 = scalar_lea.sflag [#allocation3], 1
    %8 = vsyncpa %s7, 0
    %9 = vsyncpa [#allocation4], 0
    %s10 = scalar_lea.sflag [#allocation4], 1
    %11 = vsyncpa %s10, 0
    loop: start=0, step=1, limit=4
    $region2: #{tpu_custom_call.1} parent=1 // loop_pre_header
      _
    $region3: #{tpu_custom_call.1} parent=1 // loop_header
      %s13 = sphi 0, %s17
      %p14 = scmp.ge.s32.totalorder %s13, 4
      %s20 = sphi 0, %s39
      %s21 = sphi 0, %s35
      %s22 = sphi 0, %s31
      %s23 = sphi 0, %s20
      %s24 = sphi 0, %s21
      %s25 = sphi 0, %s22
      %s26 = sphi 0, %s23
      %s27 = sphi 0, %s24
      %s28 = sphi 0, %s25
      %s46 = sphi 0, %s48
      %s49 = sphi 0, %s46
      %s50 = sphi 0, %s49
      %s66 = sphi 0, %s50
      %s74 = sphi 0, %s76
      %s77 = sphi 0, %s74
      %s78 = sphi 0, %s77
      %s94 = sphi 0, %s78
    $region4: #{tpu_custom_call.1} parent=1 // loop_header_branch
      %16 = sbr.rel (%p14) target = $region8
    $region5: #{tpu_custom_call.1} parent=1 // loop_body
      %s18 = ssub.s32 %s13, 1
      %s19 = ssub.s32 %s13, 2
      %s29 = sadd.s32 1, %s22
      %p30 = scmp.ge.s32.totalorder %s29, 1
      %s31 = scalar_select %p30, 0, %s29
      %s32 = sadd.s32 1, %s21
      %s33 = scalar_select %p30, %s32, %s21
      %p34 = scmp.ge.s32.totalorder %s33, 1
      %s35 = scalar_select %p34, 0, %s33
      %s36 = sadd.s32 1, %s20
      %s37 = scalar_select %p34, %s36, %s20
      %p38 = scmp.ge.s32.totalorder %s37, 2
      %s39 = scalar_select %p38, 0, %s37
      %s40 = sadd.s32 %s20, %s22
      %s41 = sadd.s32 %s39, %s31
      %s42 = ssub.s32 %s21, %s35
      %s43 = ssub.s32 %s40, %s41
      %s44 = sor.u32 %s42, %s43
      %p45 = scmp.eq.s32.totalorder %s44, 0
      %s47 = sadd.s32 %s46, 1
      %s48 = scalar_select %p45, %s46, %s47
      %p51 = pneg %p45
      %p52 = scmp.eq.s32.totalorder %s13, 1
      %p53 = por %p51, %p52
      %p54 = scmp.ne.s32.totalorder %s46, %s49
      %p55 = scmp.eq.s32.totalorder %s13, 0
      %p56 = por %p54, %p55
      %p57 = scmp.ne.s32.totalorder %s46, %s49
      %p58 = scmp.eq.s32.totalorder %s18, 1
      %p59 = por %p57, %p58
      %p60 = scmp.ne.s32.totalorder %s49, %s50
      %p61 = scmp.eq.s32.totalorder %s18, 0
      %p62 = por %p60, %p61
      %p63 = scmp.ne.s32.totalorder %s49, %s50
      %p64 = scmp.eq.s32.totalorder %s19, 1
      %p65 = por %p63, %p64
      %p67 = scmp.ne.s32.totalorder %s50, %s66
      %p68 = scmp.eq.s32.totalorder %s19, 0
      %p69 = por %p67, %p68
      %s70 = ssub.s32 %s20, %s39
      %s71 = ssub.s32 %s21, %s35
      %s72 = sor.u32 %s70, %s71
      %p73 = scmp.eq.s32.totalorder %s72, 0
      %s75 = sadd.s32 %s74, 1
      %s76 = scalar_select %p73, %s74, %s75
      %p79 = pneg %p73
      %p80 = scmp.eq.s32.totalorder %s13, 1
      %p81 = por %p79, %p80
      %p82 = scmp.ne.s32.totalorder %s74, %s77
      %p83 = scmp.eq.s32.totalorder %s13, 0
      %p84 = por %p82, %p83
      %p85 = scmp.ne.s32.totalorder %s74, %s77
      %p86 = scmp.eq.s32.totalorder %s18, 1
      %p87 = por %p85, %p86
      %p88 = scmp.ne.s32.totalorder %s77, %s78
      %p89 = scmp.eq.s32.totalorder %s18, 0
      %p90 = por %p88, %p89
      %p91 = scmp.ne.s32.totalorder %s77, %s78
      %p92 = scmp.eq.s32.totalorder %s19, 1
      %p93 = por %p91, %p92
      %p95 = scmp.ne.s32.totalorder %s78, %s94
      %p96 = scmp.eq.s32.totalorder %s19, 0
      %p97 = por %p95, %p96
      %p98 = scmp.le.s32.totalorder 1, %s13
      %p99 = scmp.lt.s32.totalorder %s13, 3
      %p100 = pnand %p98, %p99
      %p101 = pneg %p100
      // Predicated region
      $region9: #{tpu_custom_call.1} parent=5 // pred_check
        _
      $region10: #{tpu_custom_call.1} parent=5 // pred_check_branch
        %103 = sbr.rel (%p100) target = $region12
      $region11: #{tpu_custom_call.1} parent=5 // pred_region
        %s104 = ssub.s32 %s13, 1
      $region12: #{tpu_custom_call.1} parent=5 // pred_fallthru
        _
      %p105 = scmp.lt.s32.totalorder %s13, 2
      // Predicated region
      $region13: #{tpu_custom_call.1} parent=5 // pred_check
        %p106 = pneg %p105
      $region14: #{tpu_custom_call.1} parent=5 // pred_check_branch
        %108 = sbr.rel (%p106) target = $region16
      $region15: #{tpu_custom_call.1} parent=5 // pred_region
        // Predicated region
        $region17: #{tpu_custom_call.1} parent=15 // pred_check
          %p109 = pneg %p56
        $region18: #{tpu_custom_call.1} parent=15 // pred_check_branch
          %111 = sbr.rel (%p109) target = $region20
        $region19: #{tpu_custom_call.1} parent=15 // pred_region
          %s112 = sand.u32 %s46, 1
          %s113 = scalar_lea.sflag [#allocation3], %s112
          %s114 = sand.u32 %s46, 1
          %s115 = smul.addr %s114, 8
          %s116 = scalar_lea.vmem [#allocation2], %s115
          %s117 = sadd.s32 %s20, %s22
          %s119 = ssub.s32 128, 128
          %120 = vsyncadd %s113, %s119
          %s121 = smul.addr %s21, 2
          %s122 = sadd.s32 %s117, %s121
          %s123 = smul.addr %s122, 128
          %s124 = scalar_lea.hbm %s0, %s123
          %s126 = sshll.u32 %s116, 4
          %s127 = int_to_ptr.vmem [resolvable:$true] %s126
          %129 = dma.hbm_to_vmem [thread:$0]  %s124, 128, %s127, %s113
        $region20: #{tpu_custom_call.1} parent=15 // pred_fallthru
          _
      $region16: #{tpu_custom_call.1} parent=5 // pred_fallthru
        _
      %p130 = scmp.le.s32.totalorder 1, %s13
      %p131 = scmp.lt.s32.totalorder %s13, 3
      %p132 = pnand %p130, %p131
      %p133 = pneg %p132
      // Predicated region
      $region21: #{tpu_custom_call.1} parent=5 // pred_check
        _
      $region22: #{tpu_custom_call.1} parent=5 // pred_check_branch
        %135 = sbr.rel (%p132) target = $region24
      $region23: #{tpu_custom_call.1} parent=5 // pred_region
        %s136 = ssub.s32 %s13, 1
        %s137 = sand.u32 %s49, 1
        %s138 = scalar_lea.sflag [#allocation3], %s137
        %s139 = sand.u32 %s49, 1
        %s140 = smul.addr %s139, 8
        %s141 = scalar_lea.vmem [#allocation2], %s140
        // Predicated region
        $region25: #{tpu_custom_call.1} parent=23 // pred_check
          %p142 = pneg %p62
        $region26: #{tpu_custom_call.1} parent=23 // pred_check_branch
          %144 = sbr.rel (%p142) target = $region28
        $region27: #{tpu_custom_call.1} parent=23 // pred_region
          %145 = dma.done %s138, 128
        $region28: #{tpu_custom_call.1} parent=23 // pred_fallthru
          _
        %s146 = sand.u32 %s49, 1
        %s147 = scalar_lea.sflag [#allocation3], %s146
        %s148 = sand.u32 %s49, 1
        %s149 = smul.addr %s148, 8
        %s150 = scalar_lea.vmem [#allocation2], %s149
        %p151 = pneg %p62
        %p152 = pneg %p59
        %p153 = pneg %p90
        %p154 = pneg %p87
        %s155 = sand.u32 %s77, 1
        %s156 = scalar_lea.sflag [#allocation4], %s155
        %s157 = sand.u32 %s77, 1
        %s158 = smul.addr %s157, 8
        %s159 = scalar_lea.vmem [#allocation5], %s158
        %s160 = sadd.s32 %s23, %s25
        %p161 = scmp.eq.s32.totalorder %s25, 0
        // Predicated region
        $region29: #{tpu_custom_call.1} parent=23 // pred_check
          %p162 = pneg %p161
        $region30: #{tpu_custom_call.1} parent=23 // pred_check_branch
          %164 = sbr.rel (%p162) target = $region32
        $region31: #{tpu_custom_call.1} parent=23 // pred_region
          %vm165 = vcmask 130048
          %166 = vst.msk [vmem:[%s159] sm:$0xff] %vm165, 0.0
        $region32: #{tpu_custom_call.1} parent=23 // pred_fallthru
          _
        %v167 = vlaneseq
        %v168 = vshrl.u32 %v167, 7
        %v169 = vadd.s32 %v168, 8
        %v170 = vcvt.s32.f32 %v168
        %v171 = vcvt.s32.f32 %v169
        %v172 = vmul.f32 %v170, 2.0
        %v173 = vmul.f32 %v171, 2.0
        %v174 = vadd.f32 %v172, 1.0
        %v175 = vadd.f32 %v173, 1.0
        %v176 = vld [vmem:[%s141] sm:$0xff]
        %v177 = vmul.f32 %v176, 32.0
        %v179 = vcombine.high %v177, %v177
        %v181 = vunpack.c.l.s4 1966171168
        %v182 = vunpack.c.0.s8 %v181
        %v183 = vlaneseq
        %v184 = vshrl.u32 %v183, 7
        %v185 = vsub.s32 %v182, %v184
        %v186 = vrot.slane %v177, %v185
        %v188 = vunpack.c.l.s4 1966171168
        %v189 = vunpack.c.0.s8 %v188
        %v190 = vlaneseq
        %v191 = vshrl.u32 %v190, 7
        %v192 = vsub.s32 %v189, %v191
        %v193 = vrot.slane %v179, %v192
        %v194 = vcombine.high %v186, %v186
        %v195 = vcombine.high %v193, %v193
        %v197 = vunpack.c.l.s4 1966171168
        %v198 = vunpack.c.0.s8 %v197
        %v199 = vlaneseq
        %v200 = vshrl.u32 %v199, 7
        %v201 = vsub.s32 %v198, %v200
        %v202 = vrot.slane %v186, %v201
        %v204 = vunpack.c.l.s4 1966171168
        %v205 = vunpack.c.0.s8 %v204
        %v206 = vlaneseq
        %v207 = vshrl.u32 %v206, 7
        %v208 = vsub.s32 %v205, %v207
        %v209 = vrot.slane %v193, %v208
        %v211 = vunpack.c.l.s4 1966171168
        %v212 = vunpack.c.0.s8 %v211
        %v213 = vlaneseq
        %v214 = vshrl.u32 %v213, 7
        %v215 = vsub.s32 %v212, %v214
        %v216 = vrot.slane %v194, %v215
        %v218 = vunpack.c.l.s4 1966171168
        %v219 = vunpack.c.0.s8 %v218
        %v220 = vlaneseq
        %v221 = vshrl.u32 %v220, 7
        %v222 = vsub.s32 %v219, %v221
        %v223 = vrot.slane %v195, %v222
        %v224 = vcombine.high %v202, %v202
        %v225 = vcombine.high %v209, %v209
        %v226 = vcombine.high %v216, %v216
        %v227 = vcombine.high %v223, %v223
        %v228 = vlaneseq
        %v229 = vshrl.u32 %v228, 7
        %v230 = vsub.s32 0, %v229
        %v231 = vrot.slane %v202, %v230
        %v232 = vlaneseq
        %v233 = vshrl.u32 %v232, 7
        %v234 = vsub.s32 0, %v233
        %v235 = vrot.slane %v216, %v234
        %v236 = vlaneseq
        %v237 = vshrl.u32 %v236, 7
        %v238 = vsub.s32 0, %v237
        %v239 = vrot.slane %v224, %v238
        %v240 = vlaneseq
        %v241 = vshrl.u32 %v240, 7
        %v242 = vsub.s32 0, %v241
        %v243 = vrot.slane %v226, %v242
        %v244 = vlaneseq
        %v245 = vshrl.u32 %v244, 7
        %v246 = vsub.s32 0, %v245
        %v247 = vrot.slane %v209, %v246
        %v248 = vlaneseq
        %v249 = vshrl.u32 %v248, 7
        %v250 = vsub.s32 0, %v249
        %v251 = vrot.slane %v223, %v250
        %v252 = vlaneseq
        %v253 = vshrl.u32 %v252, 7
        %v254 = vsub.s32 0, %v253
        %v255 = vrot.slane %v225, %v254
        %v256 = vlaneseq
        %v257 = vshrl.u32 %v256, 7
        %v258 = vsub.s32 0, %v257
        %v259 = vrot.slane %v227, %v258
        %v268 = vsub.f32 %v231, %v174
        %v269 = vsub.f32 %v231, %v175
        %v270 = vsub.f32 %v235, %v174
        %v271 = vsub.f32 %v235, %v175
        %v272 = vsub.f32 %v239, %v174
        %v273 = vsub.f32 %v239, %v175
        %v274 = vsub.f32 %v243, %v174
        %v275 = vsub.f32 %v243, %v175
        %v276 = vsub.f32 %v247, %v174
        %v277 = vsub.f32 %v247, %v175
        %v278 = vsub.f32 %v251, %v174
        %v279 = vsub.f32 %v251, %v175
        %v280 = vsub.f32 %v255, %v174
        %v281 = vsub.f32 %v255, %v175
        %v282 = vsub.f32 %v259, %v174
        %v283 = vsub.f32 %v259, %v175
        %v284 = vmul.f32 %v268, %v268
        %v285 = vmul.f32 %v269, %v269
        %v286 = vmul.f32 %v270, %v270
        %v287 = vmul.f32 %v271, %v271
        %v288 = vmul.f32 %v272, %v272
        %v289 = vmul.f32 %v273, %v273
        %v290 = vmul.f32 %v274, %v274
        %v291 = vmul.f32 %v275, %v275
        %v292 = vmul.f32 %v276, %v276
        %v293 = vmul.f32 %v277, %v277
        %v294 = vmul.f32 %v278, %v278
        %v295 = vmul.f32 %v279, %v279
        %v296 = vmul.f32 %v280, %v280
        %v297 = vmul.f32 %v281, %v281
        %v298 = vmul.f32 %v282, %v282
        %v299 = vmul.f32 %v283, %v283
        %v300 = vsub.f32 0.0, %v284
        %v301 = vsub.f32 0.0, %v285
        %v302 = vsub.f32 0.0, %v286
        %v303 = vsub.f32 0.0, %v287
        %v304 = vsub.f32 0.0, %v288
        %v305 = vsub.f32 0.0, %v289
        %v306 = vsub.f32 0.0, %v290
        %v307 = vsub.f32 0.0, %v291
        %v308 = vsub.f32 0.0, %v292
        %v309 = vsub.f32 0.0, %v293
        %v310 = vsub.f32 0.0, %v294
        %v311 = vsub.f32 0.0, %v295
        %v312 = vsub.f32 0.0, %v296
        %v313 = vsub.f32 0.0, %v297
        %v314 = vsub.f32 0.0, %v298
        %v315 = vsub.f32 0.0, %v299
        %v316 = vmul.f32 %v300, 1.442695
        %v317 = vpow.pop %v316
        %v318 = vmul.f32 %v301, 1.442695
        %v319 = vpow.pop %v318
        %v320 = vmul.f32 %v302, 1.442695
        %v321 = vpow.pop %v320
        %v322 = vmul.f32 %v303, 1.442695
        %v323 = vpow.pop %v322
        %v324 = vmul.f32 %v304, 1.442695
        %v325 = vpow.pop %v324
        %v326 = vmul.f32 %v305, 1.442695
        %v327 = vpow.pop %v326
        %v328 = vmul.f32 %v306, 1.442695
        %v329 = vpow.pop %v328
        %v330 = vmul.f32 %v307, 1.442695
        %v331 = vpow.pop %v330
        %v332 = vmul.f32 %v308, 1.442695
        %v333 = vpow.pop %v332
        %v334 = vmul.f32 %v309, 1.442695
        %v335 = vpow.pop %v334
        %v336 = vmul.f32 %v310, 1.442695
        %v337 = vpow.pop %v336
        %v338 = vmul.f32 %v311, 1.442695
        %v339 = vpow.pop %v338
        %v340 = vmul.f32 %v312, 1.442695
        %v341 = vpow.pop %v340
        %v342 = vmul.f32 %v313, 1.442695
        %v343 = vpow.pop %v342
        %v344 = vmul.f32 %v314, 1.442695
        %v345 = vpow.pop %v344
        %v346 = vmul.f32 %v315, 1.442695
        %v347 = vpow.pop %v346
        %v348 = vadd.f32 %v317, 0.0
        %v349 = vadd.f32 %v319, 0.0
        %v350 = vadd.f32 %v321, 0.0
        %v351 = vadd.f32 %v323, 0.0
        %v352 = vadd.f32 %v325, 0.0
        %v353 = vadd.f32 %v327, 0.0
        %v354 = vadd.f32 %v329, 0.0
        %v355 = vadd.f32 %v331, 0.0
        %v356 = vadd.f32 %v333, 0.0
        %v357 = vadd.f32 %v335, 0.0
        %v358 = vadd.f32 %v337, 0.0
        %v359 = vadd.f32 %v339, 0.0
        %v360 = vadd.f32 %v341, 0.0
        %v361 = vadd.f32 %v343, 0.0
        %v362 = vadd.f32 %v345, 0.0
        %v363 = vadd.f32 %v347, 0.0
        %364 = vadd.xlane.f32.xlu0 %v348
        %v365 = vpop.xlane.xlu0 %364
        %366 = vadd.xlane.f32.xlu0 %v349
        %v367 = vpop.xlane.xlu0 %366
        %368 = vadd.xlane.f32.xlu0 %v350
        %v369 = vpop.xlane.xlu0 %368
        %370 = vadd.xlane.f32.xlu0 %v351
        %v371 = vpop.xlane.xlu0 %370
        %372 = vadd.xlane.f32.xlu0 %v352
        %v373 = vpop.xlane.xlu0 %372
        %374 = vadd.xlane.f32.xlu0 %v353
        %v375 = vpop.xlane.xlu0 %374
        %376 = vadd.xlane.f32.xlu0 %v354
        %v377 = vpop.xlane.xlu0 %376
        %378 = vadd.xlane.f32.xlu0 %v355
        %v379 = vpop.xlane.xlu0 %378
        %380 = vadd.xlane.f32.xlu0 %v356
        %v381 = vpop.xlane.xlu0 %380
        %382 = vadd.xlane.f32.xlu0 %v357
        %v383 = vpop.xlane.xlu0 %382
        %384 = vadd.xlane.f32.xlu0 %v358
        %v385 = vpop.xlane.xlu0 %384
        %386 = vadd.xlane.f32.xlu0 %v359
        %v387 = vpop.xlane.xlu0 %386
        %388 = vadd.xlane.f32.xlu0 %v360
        %v389 = vpop.xlane.xlu0 %388
        %390 = vadd.xlane.f32.xlu0 %v361
        %v391 = vpop.xlane.xlu0 %390
        %392 = vadd.xlane.f32.xlu0 %v362
        %v393 = vpop.xlane.xlu0 %392
        %394 = vadd.xlane.f32.xlu0 %v363
        %v395 = vpop.xlane.xlu0 %394
        %v396 = vld [vmem:[%s159] sm:$0xff]
        %v413 = vlaneseq
        %v414 = vand.u32 %v413, 127
        %v415 = vlaneseq
        %v416 = vshrl.u32 %v415, 7
        %v417 = vsub.s32 %v414, %v416
        %v418 = vrot.slane %v365, %v417
        %v419 = vadd.s32 %v414, 4294967288
        %v420 = vlaneseq
        %v421 = vshrl.u32 %v420, 7
        %v422 = vsub.s32 %v419, %v421
        %v423 = vrot.slane %v367, %v422
        %vm424 = vcmask 130112
        %v425 = vsel %vm424, %v423, %v418
        %v426 = vlaneseq
        %v427 = vshrl.u32 %v426, 7
        %v428 = vsub.s32 %v414, %v427
        %v429 = vrot.slane %v369, %v428
        %v430 = vlaneseq
        %v431 = vshrl.u32 %v430, 7
        %v432 = vsub.s32 %v419, %v431
        %v433 = vrot.slane %v371, %v432
        %v434 = vsel %vm424, %v433, %v429
        %v435 = vlaneseq
        %v436 = vshrl.u32 %v435, 7
        %v437 = vsub.s32 %v414, %v436
        %v438 = vrot.slane %v373, %v437
        %v439 = vlaneseq
        %v440 = vshrl.u32 %v439, 7
        %v441 = vsub.s32 %v419, %v440
        %v442 = vrot.slane %v375, %v441
        %v443 = vsel %vm424, %v442, %v438
        %v444 = vlaneseq
        %v445 = vshrl.u32 %v444, 7
        %v446 = vsub.s32 %v414, %v445
        %v447 = vrot.slane %v377, %v446
        %v448 = vlaneseq
        %v449 = vshrl.u32 %v448, 7
        %v450 = vsub.s32 %v419, %v449
        %v451 = vrot.slane %v379, %v450
        %v452 = vsel %vm424, %v451, %v447
        %v453 = vlaneseq
        %v454 = vshrl.u32 %v453, 7
        %v455 = vsub.s32 %v414, %v454
        %v456 = vrot.slane %v381, %v455
        %v457 = vlaneseq
        %v458 = vshrl.u32 %v457, 7
        %v459 = vsub.s32 %v419, %v458
        %v460 = vrot.slane %v383, %v459
        %v461 = vsel %vm424, %v460, %v456
        %v462 = vlaneseq
        %v463 = vshrl.u32 %v462, 7
        %v464 = vsub.s32 %v414, %v463
        %v465 = vrot.slane %v385, %v464
        %v466 = vlaneseq
        %v467 = vshrl.u32 %v466, 7
        %v468 = vsub.s32 %v419, %v467
        %v469 = vrot.slane %v387, %v468
        %v470 = vsel %vm424, %v469, %v465
        %v471 = vlaneseq
        %v472 = vshrl.u32 %v471, 7
        %v473 = vsub.s32 %v414, %v472
        %v474 = vrot.slane %v389, %v473
        %v475 = vlaneseq
        %v476 = vshrl.u32 %v475, 7
        %v477 = vsub.s32 %v419, %v476
        %v478 = vrot.slane %v391, %v477
        %v479 = vsel %vm424, %v478, %v474
        %v480 = vlaneseq
        %v481 = vshrl.u32 %v480, 7
        %v482 = vsub.s32 %v414, %v481
        %v483 = vrot.slane %v393, %v482
        %v484 = vlaneseq
        %v485 = vshrl.u32 %v484, 7
        %v486 = vsub.s32 %v419, %v485
        %v487 = vrot.slane %v395, %v486
        %v488 = vsel %vm424, %v487, %v483
        %vm489 = vcmask 1041409
        %v490 = vsel %vm489, %v434, %v425
        %vm491 = vcmask 1042434
        %v492 = vsel %vm491, %v443, %v490
        %vm493 = vcmask 1043459
        %v494 = vsel %vm493, %v452, %v492
        %vm495 = vcmask 1044484
        %v496 = vsel %vm495, %v461, %v494
        %vm497 = vcmask 1045509
        %v498 = vsel %vm497, %v470, %v496
        %vm499 = vcmask 1046534
        %v500 = vsel %vm499, %v479, %v498
        %vm501 = vcmask 1047559
        %v502 = vsel %vm501, %v488, %v500
        %v504 = vadd.f32 %v396, %v502
        %vm505 = vcmask 130048
        %506 = vst.msk [vmem:[%s159] sm:$0xff] %vm505, %v504
        %s507 = sand.u32 %s77, 1
        %s508 = scalar_lea.sflag [#allocation4], %s507
        %s509 = sand.u32 %s77, 1
        %s510 = smul.addr %s509, 8
        %s511 = scalar_lea.vmem [#allocation5], %s510
        // Predicated region
        $region33: #{tpu_custom_call.1} parent=23 // pred_check
          %p512 = pneg %p87
        $region34: #{tpu_custom_call.1} parent=23 // pred_check_branch
          %514 = sbr.rel (%p512) target = $region36
        $region35: #{tpu_custom_call.1} parent=23 // pred_region
          %s516 = ssub.s32 128, 128
          %517 = vsyncadd %s508, %s516
          %s518 = sadd.s32 %s24, %s23
          %s519 = smul.addr %s518, 128
          %s520 = scalar_lea.hbm %s1, %s519
          %s522 = sshll.u32 %s511, 4
          %s523 = int_to_ptr.vmem [resolvable:$true] %s522
          %525 = dma.vmem_to_hbm [thread:$0]  %s523, 128, %s520, %s508
        $region36: #{tpu_custom_call.1} parent=23 // pred_fallthru
          _
      $region24: #{tpu_custom_call.1} parent=5 // pred_fallthru
        _
      %p526 = scmp.le.s32.totalorder 2, %s13
      // Predicated region
      $region37: #{tpu_custom_call.1} parent=5 // pred_check
        %p527 = pneg %p526
      $region38: #{tpu_custom_call.1} parent=5 // pred_check_branch
        %529 = sbr.rel (%p527) target = $region40
      $region39: #{tpu_custom_call.1} parent=5 // pred_region
        %s530 = ssub.s32 %s13, 2
        // Predicated region
        $region41: #{tpu_custom_call.1} parent=39 // pred_check
          %p531 = pneg %p93
        $region42: #{tpu_custom_call.1} parent=39 // pred_check_branch
          %533 = sbr.rel (%p531) target = $region44
        $region43: #{tpu_custom_call.1} parent=39 // pred_region
          %s534 = sand.u32 %s78, 1
          %s535 = scalar_lea.sflag [#allocation4], %s534
          %s536 = sand.u32 %s78, 1
          %s537 = smul.addr %s536, 8
          %s538 = scalar_lea.vmem [#allocation5], %s537
          %539 = dma.done %s535, 128
        $region44: #{tpu_custom_call.1} parent=39 // pred_fallthru
          _
      $region40: #{tpu_custom_call.1} parent=5 // pred_fallthru
        _
    $region6: #{tpu_custom_call.1} parent=1 // loop_footer
      %s17 = sadd.s32 1, %s13
    $region7: #{tpu_custom_call.1} parent=1 // loop_footer_branch
      %12 = sbr.rel target = $region3
    $region8: #{tpu_custom_call.1} parent=1 // loop_exit
      _
    %540 = vsyncpa [#allocation3], 1
    %s541 = scalar_lea.sflag [#allocation3], 1
    %542 = vsyncpa %s541, 1
    %543 = vsyncpa [#allocation4], 1
    %s544 = scalar_lea.sflag [#allocation4], 1
    %545 = vsyncpa %s544, 1

</llo_original>
